<compile_context>
chip_gen: v6e
topology: v6e:2x2x1
jax: 0.10.0
libtpu: 0.0.40
codegen_flags: <defaults>
</compile_context>

<pallas_src>
import jax
import jax.numpy as jnp
from jax.experimental import pallas as pl
from jax.experimental.pallas import tpu as pltpu

EPS = 1e-5
LANE = 128


def _round_up(n, m):
    return (n + m - 1) // m * m


# ----------------------------------------------------------------------------- kernel
def _classifier_kernel(x_ref, w1_ref, b1_ref, g2_ref, bt2_ref,
                       w2_ref, b2_ref, o_ref):
    """One grid step: full (cheap, resident) first stage + one (B, TN) output tile."""
    x = x_ref[...]                                              # (B, D_pad) f32

    # --- BatchNorm1d(input_dim), training-mode batch stats (biased var) ------
    #     (affine gamma/beta folded into w1/b1 in the wrapper)
    xc = x - jnp.mean(x, axis=0, keepdims=True)
    xn = xc * jax.lax.rsqrt(jnp.mean(xc * xc, axis=0, keepdims=True) + EPS)

    # --- weight_norm Linear(input_dim -> hidden_dim), bf16 MXU, f32 accumulate
    h = jnp.dot(xn.astype(jnp.bfloat16), w1_ref[...],
                preferred_element_type=jnp.float32) + b1_ref[...]

    # --- BatchNorm1d(hidden_dim) + affine, then ReLU (all f32 on the VPU) ----
    hc = h - jnp.mean(h, axis=0, keepdims=True)
    hn = hc * jax.lax.rsqrt(jnp.mean(hc * hc, axis=0, keepdims=True) + EPS)
    hn = jnp.maximum(hn * g2_ref[...] + bt2_ref[...], 0.0)

    # --- Dropout(p=0.0) is the identity ---------------------------------------
    # TODO(synk): training-mode dropout with p > 0 (RNG mask) not implemented.

    # --- weight_norm Linear(hidden_dim -> num_answers), one lane-dense N tile -
    o_ref[...] = (jnp.dot(hn.astype(jnp.bfloat16), w2_ref[...],
                          preferred_element_type=jnp.float32)
                  + b2_ref[...]).astype(o_ref.dtype)


# ----------------------------------------------------------------------------- glue
def prepare_params(p):
    """Fold weight_norm + BN1 affine, pad feature dims to lane multiples,
    cast the DMA-dominant weights to bf16.  Pure parameter glue (runs once)."""
    D, H = p["w1_eff"].shape
    A = p["w2_eff"].shape[1]
    Dp, Hp, Ap = (_round_up(d, LANE) for d in (D, H, A))

    # Fold BN1 affine into linear1: (xn*g1 + b1n) @ W1 + b1
    #   = xn @ (g1[:, None] * W1) + (b1n @ W1 + b1)
    w1 = p["bn1_gamma"].reshape(D, 1) * p["w1_eff"]
    b1 = p["bn1_beta"].reshape(1, D) @ p["w1_eff"] + p["b1"]

    def pad2(a, r, c):
        return jnp.pad(a, ((0, r - a.shape[0]), (0, c - a.shape[1])))

    return dict(
        w1=pad2(w1, Dp, Hp).astype(jnp.bfloat16),
        b1=pad2(b1, 1, Hp),
        g2=pad2(p["bn2_gamma"], 1, Hp),
        bt2=pad2(p["bn2_beta"], 1, Hp),
        w2=pad2(p["w2_eff"], Hp, Ap).astype(jnp.bfloat16),
        b2=pad2(p["b2"], 1, Ap),
        dims=(D, H, A, Dp, Hp, Ap),
    )


def open_ended_classifier(x, prep):
    """x: (B, input_dim) float32.  prep: output of prepare_params()."""
    D, H, A, Dp, Hp, Ap = prep["dims"]
    B = x.shape[0]
    xp = jnp.pad(x.astype(jnp.float32), ((0, 0), (0, Dp - D)))

    # Lane-dense tile over num_answers.
    TN = next(t for t in (512, 256, 128) if Ap % t == 0)
    grid = (Ap // TN,)

    # VMEM budget: resident first-stage operands + double-buffered streamed tiles.
    resident = B * Dp * 4 + Dp * Hp * 2 + 3 * Hp * 4
    streamed = Hp * TN * 2 + TN * 4 + B * TN * 4
    vmem_bytes = int(min(max(2 * (resident + streamed) + (2 << 20), 16 << 20),
                         48 << 20))

    cost = pl.CostEstimate(
        flops=2 * B * (Dp * Hp + Hp * Ap),
        transcendentals=0,
        bytes_accessed=(B * Dp * 4 + Dp * Hp * 2 + Hp * Ap * 2
                        + (3 * Hp + Ap) * 4 + B * Ap * 4),
    )

    full = lambda j: (0, 0)   # resident across the N grid (DMA'd once)
    tile = lambda j: (0, j)   # streamed / double-buffered per N tile

    out = pl.pallas_call(
        _classifier_kernel,
        out_shape=jax.ShapeDtypeStruct((B, Ap), jnp.float32),
        grid_spec=pltpu.PrefetchScalarGridSpec(
            num_scalar_prefetch=0,
            grid=grid,
            in_specs=[
                pl.BlockSpec((B, Dp), full),    # x (padded)
                pl.BlockSpec((Dp, Hp), full),   # w1 (bf16, BN1 affine folded)
                pl.BlockSpec((1, Hp), full),    # b1 (folded)
                pl.BlockSpec((1, Hp), full),    # bn2 gamma
                pl.BlockSpec((1, Hp), full),    # bn2 beta
                pl.BlockSpec((Hp, TN), tile),   # w2 tile (bf16)
                pl.BlockSpec((1, TN), tile),    # b2 tile
            ],
            out_specs=pl.BlockSpec((B, TN), tile),
        ),
        compiler_params=pltpu.CompilerParams(
            dimension_semantics=("parallel",),
            vmem_limit_bytes=vmem_bytes,
        ),
        cost_estimate=cost,
    )(xp, prep["w1"], prep["b1"], prep["g2"], prep["bt2"],
      prep["w2"], prep["b2"])

    return out[:, :A]   # drop padded answer columns


# ----------------------------------------------------------------------------- params
def init_params(key, input_dim, hidden_dim, num_answers):
    """Deterministic synthetic parameters (shapes follow the PyTorch module)."""
    ks = jax.random.split(key, 8)

    bn1_gamma = 1.0 + 0.1 * jax.random.normal(ks[0], (1, input_dim), jnp.float32)
    bn1_beta = 0.1 * jax.random.normal(ks[1], (1, input_dim), jnp.float32)
    bn2_gamma = 1.0 + 0.1 * jax.random.normal(ks[2], (1, hidden_dim), jnp.float32)
    bn2_beta = 0.1 * jax.random.normal(ks[3], (1, hidden_dim), jnp.float32)

    # weight_norm(Linear, dim=None): W_eff = g * V / ||V||_F (scalar g).
    v1 = jax.random.normal(ks[4], (hidden_dim, input_dim), jnp.float32) * 0.1
    w1_eff = (jnp.float32(1.3) * v1 / jnp.linalg.norm(v1)).T        # (D, H)
    b1 = 0.1 * jax.random.normal(ks[5], (1, hidden_dim), jnp.float32)

    v2 = jax.random.normal(ks[6], (num_answers, hidden_dim), jnp.float32) * 0.1
    w2_eff = (jnp.float32(0.7) * v2 / jnp.linalg.norm(v2)).T        # (H, A)
    b2 = 0.1 * jax.random.normal(ks[7], (1, num_answers), jnp.float32)

    return dict(bn1_gamma=bn1_gamma, bn1_beta=bn1_beta, w1_eff=w1_eff, b1=b1,
                bn2_gamma=bn2_gamma, bn2_beta=bn2_beta, w2_eff=w2_eff, b2=b2)


# ----------------------------------------------------------------------------- refs
def _reference_module(x, p):
    """Pure-f32 forward of the original nn.Module (training-mode BatchNorm)."""
    m1 = jnp.mean(x, 0, keepdims=True)
    v1 = jnp.mean((x - m1) ** 2, 0, keepdims=True)
    xn = (x - m1) / jnp.sqrt(v1 + EPS) * p["bn1_gamma"] + p["bn1_beta"]
    h = xn @ p["w1_eff"] + p["b1"]
    m2 = jnp.mean(h, 0, keepdims=True)
    v2 = jnp.mean((h - m2) ** 2, 0, keepdims=True)
    hn = (h - m2) / jnp.sqrt(v2 + EPS) * p["bn2_gamma"] + p["bn2_beta"]
    hn = jnp.maximum(hn, 0.0)
    return hn @ p["w2_eff"] + p["b2"]


def _reference_prepared(x, prep):
    """Exactly the math the kernel performs (folded/padded/bf16 params) in plain JAX."""
    D, H, A, Dp, Hp, Ap = prep["dims"]
    xp = jnp.pad(x.astype(jnp.float32), ((0, 0), (0, Dp - D)))
    xc = xp - jnp.mean(xp, 0, keepdims=True)
    xn = xc * jax.lax.rsqrt(jnp.mean(xc * xc, 0, keepdims=True) + EPS)
    h = (xn.astype(jnp.bfloat16).astype(jnp.float32)
         @ prep["w1"].astype(jnp.float32)) + prep["b1"]
    hc = h - jnp.mean(h, 0, keepdims=True)
    hn = hc * jax.lax.rsqrt(jnp.mean(hc * hc, 0, keepdims=True) + EPS)
    hn = jnp.maximum(hn * prep["g2"] + prep["bt2"], 0.0)
    out = (hn.astype(jnp.bfloat16).astype(jnp.float32)
           @ prep["w2"].astype(jnp.float32)) + prep["b2"]
    return out[:, :A]


# ----------------------------------------------------------------------------- main
if __name__ == "__main__":
    # Small but non-trivial: D/H not lane-multiples (exercises padding),
    # num_answers -> padded 384 = 3 grid tiles of 128.
    B, input_dim, hidden_dim, num_answers = 8, 48, 40, 300

    key = jax.random.PRNGKey(0)
    kx, kp = jax.random.split(key)
    x = jax.random.normal(kx, (B, input_dim), jnp.float32)
    module_params = init_params(kp, input_dim, hidden_dim, num_answers)
    prep = prepare_params(module_params)

    out = jax.block_until_ready(open_ended_classifier(x, prep))
    assert out.shape == (B, num_answers)

    # Tight check against the exact (folded / padded / bf16-weight) kernel math.
    ref_exact = _reference_prepared(x, prep)
    assert jnp.allclose(out, ref_exact, atol=1e-3, rtol=1e-3), \
        float(jnp.max(jnp.abs(out - ref_exact)))

    # Looser check against the pure-f32 module forward (bf16 weight storage).
    ref_module = _reference_module(x, module_params)
    assert jnp.allclose(out, ref_module, atol=2e-2, rtol=2e-2), \
        float(jnp.max(jnp.abs(out - ref_module)))

    print("KERNEL_OK")
</pallas_src>

<mosaic_0001>
module attributes {stable_mosaic.version = 11 : i64} {
  func.func @_classifier_kernel(%arg0: i32, %arg1: memref<8x128xf32, #tpu.memory_space<vmem>>, %arg2: memref<128x128xbf16, #tpu.memory_space<vmem>>, %arg3: memref<1x128xf32, #tpu.memory_space<vmem>>, %arg4: memref<1x128xf32, #tpu.memory_space<vmem>>, %arg5: memref<1x128xf32, #tpu.memory_space<vmem>>, %arg6: memref<128x128xbf16, #tpu.memory_space<vmem>>, %arg7: memref<1x128xf32, #tpu.memory_space<vmem>>, %arg8: memref<8x128xf32, #tpu.memory_space<vmem>>) attributes {dimension_semantics = [#tpu.dimension_semantics<parallel>], iteration_bounds = array<i64: 3>, scalar_prefetch = 0 : i64, scratch_operands = 0 : i64, tpu.core_type = #tpu.core_type<tc>, window_params = [{pipeline_mode = #tpu.pipeline_mode<synchronous>, transform_indices = @transform_0, window_bounds = array<i64: 8, 128>}, {pipeline_mode = #tpu.pipeline_mode<synchronous>, transform_indices = @transform_1, window_bounds = array<i64: 128, 128>}, {pipeline_mode = #tpu.pipeline_mode<synchronous>, transform_indices = @transform_2, window_bounds = array<i64: 1, 128>}, {pipeline_mode = #tpu.pipeline_mode<synchronous>, transform_indices = @transform_3, window_bounds = array<i64: 1, 128>}, {pipeline_mode = #tpu.pipeline_mode<synchronous>, transform_indices = @transform_4, window_bounds = array<i64: 1, 128>}, {transform_indices = @transform_5, window_bounds = array<i64: 128, 128>}, {transform_indices = @transform_6, window_bounds = array<i64: 1, 128>}, {transform_indices = @transform_7, window_bounds = array<i64: 8, 128>}]} {
    %c0 = arith.constant 0 : index
    %c0_0 = arith.constant 0 : index
    %0 = vector.load %arg1[%c0, %c0_0] : memref<8x128xf32, #tpu.memory_space<vmem>>, vector<8x128xf32>
    %cst = arith.constant dense<0.000000e+00> : vector<128xf32>
    %1 = vector.multi_reduction <add>, %0, %cst [0] : vector<8x128xf32> to vector<128xf32>
    %2 = vector.shape_cast %1 : vector<128xf32> to vector<1x128xf32>
    %cst_1 = arith.constant 8.000000e+00 : f32
    %3 = vector.broadcast %cst_1 : f32 to vector<1x128xf32>
    %4 = arith.divf %2, %3 : vector<1x128xf32>
    %5 = vector.broadcast %4 : vector<1x128xf32> to vector<8x128xf32>
    %6 = arith.subf %0, %5 : vector<8x128xf32>
    %7 = arith.mulf %6, %6 : vector<8x128xf32>
    %cst_2 = arith.constant dense<0.000000e+00> : vector<128xf32>
    %8 = vector.multi_reduction <add>, %7, %cst_2 [0] : vector<8x128xf32> to vector<128xf32>
    %9 = vector.shape_cast %8 : vector<128xf32> to vector<1x128xf32>
    %cst_3 = arith.constant 8.000000e+00 : f32
    %10 = vector.broadcast %cst_3 : f32 to vector<1x128xf32>
    %11 = arith.divf %9, %10 : vector<1x128xf32>
    %cst_4 = arith.constant 9.99999974E-6 : f32
    %12 = vector.broadcast %cst_4 : f32 to vector<1x128xf32>
    %13 = arith.addf %11, %12 : vector<1x128xf32>
    %14 = math.rsqrt %13 : vector<1x128xf32>
    %15 = vector.broadcast %14 : vector<1x128xf32> to vector<8x128xf32>
    %16 = arith.mulf %6, %15 : vector<8x128xf32>
    %17 = arith.truncf %16 : vector<8x128xf32> to vector<8x128xbf16>
    %c0_5 = arith.constant 0 : index
    %c0_6 = arith.constant 0 : index
    %18 = vector.load %arg2[%c0_5, %c0_6] : memref<128x128xbf16, #tpu.memory_space<vmem>>, vector<128x128xbf16>
    %cst_7 = arith.constant dense<0.000000e+00> : vector<8x128xf32>
    %19 = tpu.matmul %17, %18, %cst_7 {dimension_numbers = #tpu.dot_dimension_numbers<[1], [0], [0], [1], [0, 0, 1, 1], [], []>} : vector<8x128xbf16>, vector<128x128xbf16>, vector<8x128xf32> -> vector<8x128xf32>
    %c0_8 = arith.constant 0 : index
    %c0_9 = arith.constant 0 : index
    %20 = vector.load %arg3[%c0_8, %c0_9] : memref<1x128xf32, #tpu.memory_space<vmem>>, vector<1x128xf32>
    %21 = vector.broadcast %20 : vector<1x128xf32> to vector<8x128xf32>
    %22 = arith.addf %19, %21 : vector<8x128xf32>
    %cst_10 = arith.constant dense<0.000000e+00> : vector<128xf32>
    %23 = vector.multi_reduction <add>, %22, %cst_10 [0] : vector<8x128xf32> to vector<128xf32>
    %24 = vector.shape_cast %23 : vector<128xf32> to vector<1x128xf32>
    %cst_11 = arith.constant 8.000000e+00 : f32
    %25 = vector.broadcast %cst_11 : f32 to vector<1x128xf32>
    %26 = arith.divf %24, %25 : vector<1x128xf32>
    %27 = vector.broadcast %26 : vector<1x128xf32> to vector<8x128xf32>
    %28 = arith.subf %22, %27 : vector<8x128xf32>
    %29 = arith.mulf %28, %28 : vector<8x128xf32>
    %cst_12 = arith.constant dense<0.000000e+00> : vector<128xf32>
    %30 = vector.multi_reduction <add>, %29, %cst_12 [0] : vector<8x128xf32> to vector<128xf32>
    %31 = vector.shape_cast %30 : vector<128xf32> to vector<1x128xf32>
    %cst_13 = arith.constant 8.000000e+00 : f32
    %32 = vector.broadcast %cst_13 : f32 to vector<1x128xf32>
    %33 = arith.divf %31, %32 : vector<1x128xf32>
    %cst_14 = arith.constant 9.99999974E-6 : f32
    %34 = vector.broadcast %cst_14 : f32 to vector<1x128xf32>
    %35 = arith.addf %33, %34 : vector<1x128xf32>
    %36 = math.rsqrt %35 : vector<1x128xf32>
    %37 = vector.broadcast %36 : vector<1x128xf32> to vector<8x128xf32>
    %38 = arith.mulf %28, %37 : vector<8x128xf32>
    %c0_15 = arith.constant 0 : index
    %c0_16 = arith.constant 0 : index
    %39 = vector.load %arg4[%c0_15, %c0_16] : memref<1x128xf32, #tpu.memory_space<vmem>>, vector<1x128xf32>
    %40 = vector.broadcast %39 : vector<1x128xf32> to vector<8x128xf32>
    %41 = arith.mulf %38, %40 : vector<8x128xf32>
    %c0_17 = arith.constant 0 : index
    %c0_18 = arith.constant 0 : index
    %42 = vector.load %arg5[%c0_17, %c0_18] : memref<1x128xf32, #tpu.memory_space<vmem>>, vector<1x128xf32>
    %43 = vector.broadcast %42 : vector<1x128xf32> to vector<8x128xf32>
    %44 = arith.addf %41, %43 : vector<8x128xf32>
    %cst_19 = arith.constant 0.000000e+00 : f32
    %45 = vector.broadcast %cst_19 : f32 to vector<8x128xf32>
    %46 = arith.maximumf %44, %45 : vector<8x128xf32>
    %47 = arith.truncf %46 : vector<8x128xf32> to vector<8x128xbf16>
    %c0_20 = arith.constant 0 : index
    %c0_21 = arith.constant 0 : index
    %48 = vector.load %arg6[%c0_20, %c0_21] : memref<128x128xbf16, #tpu.memory_space<vmem>>, vector<128x128xbf16>
    %cst_22 = arith.constant dense<0.000000e+00> : vector<8x128xf32>
    %49 = tpu.matmul %47, %48, %cst_22 {dimension_numbers = #tpu.dot_dimension_numbers<[1], [0], [0], [1], [0, 0, 1, 1], [], []>} : vector<8x128xbf16>, vector<128x128xbf16>, vector<8x128xf32> -> vector<8x128xf32>
    %c0_23 = arith.constant 0 : index
    %c0_24 = arith.constant 0 : index
    %50 = vector.load %arg7[%c0_23, %c0_24] : memref<1x128xf32, #tpu.memory_space<vmem>>, vector<1x128xf32>
    %51 = vector.broadcast %50 : vector<1x128xf32> to vector<8x128xf32>
    %52 = arith.addf %49, %51 : vector<8x128xf32>
    %c0_25 = arith.constant 0 : index
    %c0_26 = arith.constant 0 : index
    %53 = vector.load %arg8[%c0_25, %c0_26] : memref<8x128xf32, #tpu.memory_space<vmem>>, vector<8x128xf32>
    tpu.vector_store %arg8[%c0_25, %c0_26], %52 {strides = array<i32>} : memref<8x128xf32, #tpu.memory_space<vmem>>, vector<8x128xf32>,
    return
  }
  func.func @transform_0(%arg0: i32) -> (i32, i32) {
    %c0_i32 = arith.constant 0 : i32
    %c0_i32_0 = arith.constant 0 : i32
    %c0_i32_1 = arith.constant 0 : i32
    return %c0_i32, %c0_i32_0 : i32, i32
  }
  func.func @transform_1(%arg0: i32) -> (i32, i32) {
    %c0_i32 = arith.constant 0 : i32
    %c0_i32_0 = arith.constant 0 : i32
    %c0_i32_1 = arith.constant 0 : i32
    return %c0_i32, %c0_i32_0 : i32, i32
  }
  func.func @transform_2(%arg0: i32) -> (i32, i32) {
    %c0_i32 = arith.constant 0 : i32
    %c0_i32_0 = arith.constant 0 : i32
    %c0_i32_1 = arith.constant 0 : i32
    return %c0_i32, %c0_i32_0 : i32, i32
  }
  func.func @transform_3(%arg0: i32) -> (i32, i32) {
    %c0_i32 = arith.constant 0 : i32
    %c0_i32_0 = arith.constant 0 : i32
    %c0_i32_1 = arith.constant 0 : i32
    return %c0_i32, %c0_i32_0 : i32, i32
  }
  func.func @transform_4(%arg0: i32) -> (i32, i32) {
    %c0_i32 = arith.constant 0 : i32
    %c0_i32_0 = arith.constant 0 : i32
    %c0_i32_1 = arith.constant 0 : i32
    return %c0_i32, %c0_i32_0 : i32, i32
  }
  func.func @transform_5(%arg0: i32) -> (i32, i32) {
    %c0_i32 = arith.constant 0 : i32
    %c0_i32_0 = arith.constant 0 : i32
    return %c0_i32, %arg0 : i32, i32
  }
  func.func @transform_6(%arg0: i32) -> (i32, i32) {
    %c0_i32 = arith.constant 0 : i32
    %c0_i32_0 = arith.constant 0 : i32
    return %c0_i32, %arg0 : i32, i32
  }
  func.func @transform_7(%arg0: i32) -> (i32, i32) {
    %c0_i32 = arith.constant 0 : i32
    %c0_i32_0 = arith.constant 0 : i32
    return %c0_i32, %arg0 : i32, i32
  }
}

</mosaic_0001>

<llo_original>
// kernel: tpu_custom_call.1
$region0: #{tpu_custom_call.1}
  #allocation0 [shape = 'u32[]', space=smem, size = 0x4, offset = 0x4, fixed_abs, tag = 'smem constant byte address 0x4 - core index']
  #allocation1 [shape = 'u32[144,128]{1,0:T(1,128)}', space=vmem, size = 0x12000, scoped, tag = 'internal scratch']
  %s0 = inlined_call_operand.hbm [shape: f32[8,128], index: 0, kind: input, shape index: {}]
  %s1 = inlined_call_operand.hbm [shape: bf16[128,128], index: 1, kind: input, shape index: {}]
  %s2 = inlined_call_operand.vmem [shape: f32[1,128], index: 2, kind: input, shape index: {}]
  %s3 = inlined_call_operand.vmem [shape: f32[1,128], index: 3, kind: input, shape index: {}]
  %s4 = inlined_call_operand.vmem [shape: f32[1,128], index: 4, kind: input, shape index: {}]
  %s5 = inlined_call_operand.hbm [shape: bf16[128,384], index: 5, kind: input, shape index: {}]
  %s6 = inlined_call_operand.vmem [shape: f32[1,384], index: 6, kind: input, shape index: {}]
  %s7 = inlined_call_operand.hbm [shape: f32[8,384], index: 7, kind: output, shape index: {}]
  %s8 = sld [smem:[#allocation0]]
  $region73: #{tpu_custom_call.1} parent=0
    _
  %s10 = ssub.s32 1, %s8
  %s11 = scalar_select 0, %s10, %s8
  $region1: #{tpu_custom_call.1} parent=0
    #allocation2 [shape = 'u8[4096]{0}', space=vmem, size = 0x1000, scoped, tag = 'input window, operand 0, single buffered']
    #allocation3 [shape = 's32[2]{0}', space=sflag, size = 0x8, scoped, tag = 'scoped memory for tpu_custom_call.1']
    #allocation4 [shape = 's32[2]{0}', space=sflag, size = 0x8, scoped, tag = 'scoped memory for tpu_custom_call.1']
    #allocation5 [shape = 'u8[32768]{0}', space=vmem, size = 0x8000, scoped, tag = 'input window, operand 1, single buffered']
    #allocation6 [shape = 's32[1]{0}', space=sflag, size = 0x4, scoped, tag = 'scoped memory for tpu_custom_call.1']
    #allocation7 [shape = 'u8[65536]{0}', space=vmem, size = 0x10000, scoped, tag = 'input window, operand 5']
    #allocation8 [shape = 'u8[8192]{0}', space=vmem, size = 0x2000, scoped, tag = 'output window, operand 0']
    %12 = vsyncpa [#allocation3], 0
    %13 = vsyncpa [#allocation6], 0
    %14 = vsyncpa [#allocation4], 0
    %s15 = scalar_lea.sflag [#allocation4], 1
    %16 = vsyncpa %s15, 0
    loop: start=0, step=1, limit=5
    $region2: #{tpu_custom_call.1} parent=1 // loop_pre_header
      _
    $region3: #{tpu_custom_call.1} parent=1 // loop_header
      %s18 = sphi 0, %s22
      %p19 = scmp.ge.s32.totalorder %s18, 5
      %s26 = sphi 0, %s26
      %s28 = sphi 0, %s26
      %s29 = sphi 0, %s28
      %s43 = sphi 0, %s29
      %s47 = sphi 0, %s47
      %s49 = sphi 0, %s47
      %s50 = sphi 0, %s49
      %s64 = sphi 0, %s50
      %s68 = sphi 0, %s68
      %s70 = sphi 0, %s68
      %s71 = sphi 0, %s70
      %s85 = sphi 0, %s71
      %s89 = sphi 0, %s89
      %s91 = sphi 0, %s89
      %s92 = sphi 0, %s91
      %s106 = sphi 0, %s92
      %s110 = sphi 0, %s110
      %s112 = sphi 0, %s110
      %s113 = sphi 0, %s112
      %s127 = sphi 0, %s113
      %s133 = sphi 0, %s135
      %s136 = sphi 0, %s133
      %s137 = sphi 0, %s136
      %s153 = sphi 0, %s137
      %s159 = sphi 0, %s161
      %s162 = sphi 0, %s159
      %s163 = sphi 0, %s162
      %s179 = sphi 0, %s163
      %s185 = sphi 0, %s187
      %s188 = sphi 0, %s185
      %s189 = sphi 0, %s188
      %s205 = sphi 0, %s189
    $region4: #{tpu_custom_call.1} parent=1 // loop_header_branch
      %21 = sbr.rel (%p19) target = $region8
    $region5: #{tpu_custom_call.1} parent=1 // loop_body
      %s23 = ssub.s32 %s18, 1
      %s24 = ssub.s32 %s18, 2
      %s25 = sadd.s32 %s18, 1
      %s27 = sadd.s32 %s26, 1
      %p30 = scmp.eq.s32.totalorder %s18, 2
      %p31 = scmp.ne.s32.totalorder %s26, %s28
      %p32 = scmp.eq.s32.totalorder %s18, 0
      %p33 = por %p31, %p32
      %p34 = scmp.ne.s32.totalorder %s26, %s28
      %p35 = scmp.eq.s32.totalorder %s23, 2
      %p36 = por %p34, %p35
      %p37 = scmp.ne.s32.totalorder %s28, %s29
      %p38 = scmp.eq.s32.totalorder %s23, 0
      %p39 = por %p37, %p38
      %p40 = scmp.ne.s32.totalorder %s28, %s29
      %p41 = scmp.eq.s32.totalorder %s24, 2
      %p42 = por %p40, %p41
      %p44 = scmp.ne.s32.totalorder %s29, %s43
      %p45 = scmp.eq.s32.totalorder %s24, 0
      %p46 = por %p44, %p45
      %s48 = sadd.s32 %s47, 1
      %p51 = scmp.eq.s32.totalorder %s18, 2
      %p52 = scmp.ne.s32.totalorder %s47, %s49
      %p53 = scmp.eq.s32.totalorder %s18, 0
      %p54 = por %p52, %p53
      %p55 = scmp.ne.s32.totalorder %s47, %s49
      %p56 = scmp.eq.s32.totalorder %s23, 2
      %p57 = por %p55, %p56
      %p58 = scmp.ne.s32.totalorder %s49, %s50
      %p59 = scmp.eq.s32.totalorder %s23, 0
      %p60 = por %p58, %p59
      %p61 = scmp.ne.s32.totalorder %s49, %s50
      %p62 = scmp.eq.s32.totalorder %s24, 2
      %p63 = por %p61, %p62
      %p65 = scmp.ne.s32.totalorder %s50, %s64
      %p66 = scmp.eq.s32.totalorder %s24, 0
      %p67 = por %p65, %p66
      %s69 = sadd.s32 %s68, 1
      %p72 = scmp.eq.s32.totalorder %s18, 2
      %p73 = scmp.ne.s32.totalorder %s68, %s70
      %p74 = scmp.eq.s32.totalorder %s18, 0
      %p75 = por %p73, %p74
      %p76 = scmp.ne.s32.totalorder %s68, %s70
      %p77 = scmp.eq.s32.totalorder %s23, 2
      %p78 = por %p76, %p77
      %p79 = scmp.ne.s32.totalorder %s70, %s71
      %p80 = scmp.eq.s32.totalorder %s23, 0
      %p81 = por %p79, %p80
      %p82 = scmp.ne.s32.totalorder %s70, %s71
      %p83 = scmp.eq.s32.totalorder %s24, 2
      %p84 = por %p82, %p83
      %p86 = scmp.ne.s32.totalorder %s71, %s85
      %p87 = scmp.eq.s32.totalorder %s24, 0
      %p88 = por %p86, %p87
      %s90 = sadd.s32 %s89, 1
      %p93 = scmp.eq.s32.totalorder %s18, 2
      %p94 = scmp.ne.s32.totalorder %s89, %s91
      %p95 = scmp.eq.s32.totalorder %s18, 0
      %p96 = por %p94, %p95
      %p97 = scmp.ne.s32.totalorder %s89, %s91
      %p98 = scmp.eq.s32.totalorder %s23, 2
      %p99 = por %p97, %p98
      %p100 = scmp.ne.s32.totalorder %s91, %s92
      %p101 = scmp.eq.s32.totalorder %s23, 0
      %p102 = por %p100, %p101
      %p103 = scmp.ne.s32.totalorder %s91, %s92
      %p104 = scmp.eq.s32.totalorder %s24, 2
      %p105 = por %p103, %p104
      %p107 = scmp.ne.s32.totalorder %s92, %s106
      %p108 = scmp.eq.s32.totalorder %s24, 0
      %p109 = por %p107, %p108
      %s111 = sadd.s32 %s110, 1
      %p114 = scmp.eq.s32.totalorder %s18, 2
      %p115 = scmp.ne.s32.totalorder %s110, %s112
      %p116 = scmp.eq.s32.totalorder %s18, 0
      %p117 = por %p115, %p116
      %p118 = scmp.ne.s32.totalorder %s110, %s112
      %p119 = scmp.eq.s32.totalorder %s23, 2
      %p120 = por %p118, %p119
      %p121 = scmp.ne.s32.totalorder %s112, %s113
      %p122 = scmp.eq.s32.totalorder %s23, 0
      %p123 = por %p121, %p122
      %p124 = scmp.ne.s32.totalorder %s112, %s113
      %p125 = scmp.eq.s32.totalorder %s24, 2
      %p126 = por %p124, %p125
      %p128 = scmp.ne.s32.totalorder %s113, %s127
      %p129 = scmp.eq.s32.totalorder %s24, 0
      %p130 = por %p128, %p129
      %s131 = ssub.s32 %s18, %s25
      %p132 = scmp.eq.s32.totalorder %s131, 0
      %s134 = sadd.s32 %s133, 1
      %s135 = scalar_select %p132, %s133, %s134
      %p138 = pneg %p132
      %p139 = scmp.eq.s32.totalorder %s18, 2
      %p140 = por %p138, %p139
      %p141 = scmp.ne.s32.totalorder %s133, %s136
      %p142 = scmp.eq.s32.totalorder %s18, 0
      %p143 = por %p141, %p142
      %p144 = scmp.ne.s32.totalorder %s133, %s136
      %p145 = scmp.eq.s32.totalorder %s23, 2
      %p146 = por %p144, %p145
      %p147 = scmp.ne.s32.totalorder %s136, %s137
      %p148 = scmp.eq.s32.totalorder %s23, 0
      %p149 = por %p147, %p148
      %p150 = scmp.ne.s32.totalorder %s136, %s137
      %p151 = scmp.eq.s32.totalorder %s24, 2
      %p152 = por %p150, %p151
      %p154 = scmp.ne.s32.totalorder %s137, %s153
      %p155 = scmp.eq.s32.totalorder %s24, 0
      %p156 = por %p154, %p155
      %s157 = ssub.s32 %s18, %s25
      %p158 = scmp.eq.s32.totalorder %s157, 0
      %s160 = sadd.s32 %s159, 1
      %s161 = scalar_select %p158, %s159, %s160
      %p164 = pneg %p158
      %p165 = scmp.eq.s32.totalorder %s18, 2
      %p166 = por %p164, %p165
      %p167 = scmp.ne.s32.totalorder %s159, %s162
      %p168 = scmp.eq.s32.totalorder %s18, 0
      %p169 = por %p167, %p168
      %p170 = scmp.ne.s32.totalorder %s159, %s162
      %p171 = scmp.eq.s32.totalorder %s23, 2
      %p172 = por %p170, %p171
      %p173 = scmp.ne.s32.totalorder %s162, %s163
      %p174 = scmp.eq.s32.totalorder %s23, 0
      %p175 = por %p173, %p174
      %p176 = scmp.ne.s32.totalorder %s162, %s163
      %p177 = scmp.eq.s32.totalorder %s24, 2
      %p178 = por %p176, %p177
      %p180 = scmp.ne.s32.totalorder %s163, %s179
      %p181 = scmp.eq.s32.totalorder %s24, 0
      %p182 = por %p180, %p181
      %s183 = ssub.s32 %s18, %s25
      %p184 = scmp.eq.s32.totalorder %s183, 0
      %s186 = sadd.s32 %s185, 1
      %s187 = scalar_select %p184, %s185, %s186
      %p190 = pneg %p184
      %p191 = scmp.eq.s32.totalorder %s18, 2
      %p192 = por %p190, %p191
      %p193 = scmp.ne.s32.totalorder %s185, %s188
      %p194 = scmp.eq.s32.totalorder %s18, 0
      %p195 = por %p193, %p194
      %p196 = scmp.ne.s32.totalorder %s185, %s188
      %p197 = scmp.eq.s32.totalorder %s23, 2
      %p198 = por %p196, %p197
      %p199 = scmp.ne.s32.totalorder %s188, %s189
      %p200 = scmp.eq.s32.totalorder %s23, 0
      %p201 = por %p199, %p200
      %p202 = scmp.ne.s32.totalorder %s188, %s189
      %p203 = scmp.eq.s32.totalorder %s24, 2
      %p204 = por %p202, %p203
      %p206 = scmp.ne.s32.totalorder %s189, %s205
      %p207 = scmp.eq.s32.totalorder %s24, 0
      %p208 = por %p206, %p207
      %p209 = scmp.le.s32.totalorder 1, %s18
      %p210 = scmp.lt.s32.totalorder %s18, 4
      %p211 = pnand %p209, %p210
      %p212 = pneg %p211
      // Predicated region
      $region9: #{tpu_custom_call.1} parent=5 // pred_check
        _
      $region10: #{tpu_custom_call.1} parent=5 // pred_check_branch
        %214 = sbr.rel (%p211) target = $region12
      $region11: #{tpu_custom_call.1} parent=5 // pred_region
        %s215 = ssub.s32 %s18, 1
        // Predicated region
        $region13: #{tpu_custom_call.1} parent=11 // pred_check
          %p216 = pneg %p39
        $region14: #{tpu_custom_call.1} parent=11 // pred_check_branch
          %218 = sbr.rel (%p216) target = $region16
        $region15: #{tpu_custom_call.1} parent=11 // pred_region
          %s220 = ssub.s32 128, 128
          %221 = vsyncadd [#allocation3], %s220
          %s223 = sshll.u32 [#allocation2], 4
          %s224 = int_to_ptr.vmem [resolvable:$true] %s223
          %226 = dma.hbm_to_vmem [thread:$0]  %s0, 128, %s224, [#allocation3]
        $region16: #{tpu_custom_call.1} parent=11 // pred_fallthru
          _
        // Predicated region
        $region17: #{tpu_custom_call.1} parent=11 // pred_check
          %p227 = pneg %p60
        $region18: #{tpu_custom_call.1} parent=11 // pred_check_branch
          %229 = sbr.rel (%p227) target = $region20
        $region19: #{tpu_custom_call.1} parent=11 // pred_region
          %s231 = ssub.s32 1024, 1024
          %232 = vsyncadd [#allocation6], %s231
          %s233 = sshll.u32 [#allocation5], 4
          %s234 = int_to_ptr.vmem [resolvable:$true] %s233
          %239 = dma.hbm_to_vmem [thread:$0]  %s1, 1024, %s234, [#allocation6], 64, 64, 4
        $region20: #{tpu_custom_call.1} parent=11 // pred_fallthru
          _
        // Predicated region
        $region21: #{tpu_custom_call.1} parent=11 // pred_check
          %p240 = pneg %p81
        $region22: #{tpu_custom_call.1} parent=11 // pred_check_branch
          %242 = sbr.rel (%p240) target = $region24
        $region23: #{tpu_custom_call.1} parent=11 // pred_region
          _
        $region24: #{tpu_custom_call.1} parent=11 // pred_fallthru
          _
        // Predicated region
        $region25: #{tpu_custom_call.1} parent=11 // pred_check
          %p243 = pneg %p102
        $region26: #{tpu_custom_call.1} parent=11 // pred_check_branch
          %245 = sbr.rel (%p243) target = $region28
        $region27: #{tpu_custom_call.1} parent=11 // pred_region
          _
        $region28: #{tpu_custom_call.1} parent=11 // pred_fallthru
          _
        // Predicated region
        $region29: #{tpu_custom_call.1} parent=11 // pred_check
          %p246 = pneg %p123
        $region30: #{tpu_custom_call.1} parent=11 // pred_check_branch
          %248 = sbr.rel (%p246) target = $region32
        $region31: #{tpu_custom_call.1} parent=11 // pred_region
          _
        $region32: #{tpu_custom_call.1} parent=11 // pred_fallthru
          _
      $region12: #{tpu_custom_call.1} parent=5 // pred_fallthru
        _
      %p249 = scmp.lt.s32.totalorder %s18, 3
      // Predicated region
      $region33: #{tpu_custom_call.1} parent=5 // pred_check
        %p250 = pneg %p249
      $region34: #{tpu_custom_call.1} parent=5 // pred_check_branch
        %252 = sbr.rel (%p250) target = $region36
      $region35: #{tpu_custom_call.1} parent=5 // pred_region
        // Predicated region
        $region37: #{tpu_custom_call.1} parent=35 // pred_check
          %p253 = pneg %p143
        $region38: #{tpu_custom_call.1} parent=35 // pred_check_branch
          %255 = sbr.rel (%p253) target = $region40
        $region39: #{tpu_custom_call.1} parent=35 // pred_region
          %s256 = sand.u32 %s18, 1
          %s257 = scalar_lea.sflag [#allocation3], %s256
          %s258 = sand.u32 %s133, 1
          %s259 = smul.addr %s258, 64
          %s260 = scalar_lea.vmem [#allocation7], %s259
          %s262 = ssub.s32 1024, 1024
          %263 = vsyncadd %s257, %s262
          %s264 = smul.addr %s18, 64
          %s265 = scalar_lea.hbm %s5, %s264
          %s266 = sshll.u32 %s260, 4
          %s267 = int_to_ptr.vmem [resolvable:$true] %s266
          %272 = dma.hbm_to_vmem [thread:$0]  %s265, 1024, %s267, %s257, 192, 64, 4
        $region40: #{tpu_custom_call.1} parent=35 // pred_fallthru
          _
        // Predicated region
        $region41: #{tpu_custom_call.1} parent=35 // pred_check
          %p273 = pneg %p169
        $region42: #{tpu_custom_call.1} parent=35 // pred_check_branch
          %275 = sbr.rel (%p273) target = $region44
        $region43: #{tpu_custom_call.1} parent=35 // pred_region
          %p276 = scmp.lt.s32.totalorder %s18, 2
          %s277 = scalar_select %p276, %s18, 2
          %s278 = scalar_lea.vmem %s6, %s277
        $region44: #{tpu_custom_call.1} parent=35 // pred_fallthru
          _
      $region36: #{tpu_custom_call.1} parent=5 // pred_fallthru
        _
      %p279 = scmp.le.s32.totalorder 1, %s18
      %p280 = scmp.lt.s32.totalorder %s18, 4
      %p281 = pnand %p279, %p280
      %p282 = pneg %p281
      // Predicated region
      $region45: #{tpu_custom_call.1} parent=5 // pred_check
        _
      $region46: #{tpu_custom_call.1} parent=5 // pred_check_branch
        %284 = sbr.rel (%p281) target = $region48
      $region47: #{tpu_custom_call.1} parent=5 // pred_region
        %s285 = ssub.s32 %s18, 1
        // Predicated region
        $region49: #{tpu_custom_call.1} parent=47 // pred_check
          %p286 = pneg %p39
        $region50: #{tpu_custom_call.1} parent=47 // pred_check_branch
          %288 = sbr.rel (%p286) target = $region52
        $region51: #{tpu_custom_call.1} parent=47 // pred_region
          %289 = dma.done [#allocation3], 128
        $region52: #{tpu_custom_call.1} parent=47 // pred_fallthru
          _
        // Predicated region
        $region53: #{tpu_custom_call.1} parent=47 // pred_check
          %p290 = pneg %p60
        $region54: #{tpu_custom_call.1} parent=47 // pred_check_branch
          %292 = sbr.rel (%p290) target = $region56
        $region55: #{tpu_custom_call.1} parent=47 // pred_region
          %293 = dma.done [#allocation6], 1024
        $region56: #{tpu_custom_call.1} parent=47 // pred_fallthru
          _
        %s294 = sand.u32 %s23, 1
        %s295 = scalar_lea.sflag [#allocation3], %s294
        %s296 = sand.u32 %s136, 1
        %s297 = smul.addr %s296, 64
        %s298 = scalar_lea.vmem [#allocation7], %s297
        // Predicated region
        $region57: #{tpu_custom_call.1} parent=47 // pred_check
          %p299 = pneg %p149
        $region58: #{tpu_custom_call.1} parent=47 // pred_check_branch
          %301 = sbr.rel (%p299) target = $region60
        $region59: #{tpu_custom_call.1} parent=47 // pred_region
          %302 = dma.done %s295, 1024
        $region60: #{tpu_custom_call.1} parent=47 // pred_fallthru
          _
        %p303 = pneg %p39
        %p304 = pneg %p36
        %p305 = pneg %p60
        %p306 = pneg %p57
        %p307 = pneg %p81
        %p308 = pneg %p78
        %p309 = pneg %p102
        %p310 = pneg %p99
        %p311 = pneg %p123
        %p312 = pneg %p120
        %s313 = sand.u32 %s23, 1
        %s314 = scalar_lea.sflag [#allocation3], %s313
        %s315 = sand.u32 %s136, 1
        %s316 = smul.addr %s315, 64
        %s317 = scalar_lea.vmem [#allocation7], %s316
        %p318 = pneg %p149
        %p319 = pneg %p146
        %p320 = scmp.lt.s32.totalorder %s23, 2
        %s321 = scalar_select %p320, %s23, 2
        %s322 = scalar_lea.vmem %s6, %s321
        %p323 = pneg %p175
        %p324 = pneg %p172
        %p325 = pneg %p201
        %p326 = pneg %p198
        %s327 = sand.u32 %s188, 1
        %s328 = scalar_lea.sflag [#allocation4], %s327
        %s329 = sand.u32 %s188, 1
        %s330 = smul.addr %s329, 8
        %s331 = scalar_lea.vmem [#allocation8], %s330
        %p332 = scmp.lt.s32.totalorder %s23, 2
        %s333 = scalar_select %p332, %s23, 2
        %s334 = scalar_lea.vmem %s6, %s333
        %v336 = vld [vmem:[#allocation2] sm:$0xff]
        %v337 = vrot.slane %v336, 4
        %v338 = vadd.f32 %v336, %v337
        %v339 = vrot.slane %v338, 2
        %v340 = vadd.f32 %v338, %v339
        %v341 = vrot.slane %v340, 1
        %v342 = vadd.f32 %v340, %v341
        %v343 = vrcp.pop 8.0
        %v344 = vmul.f32 %v342, %v343
        %v345 = vsub.f32 %v336, %v344
        %v346 = vmul.f32 %v345, %v345
        %v347 = vrot.slane %v346, 4
        %v348 = vadd.f32 %v346, %v347
        %v349 = vrot.slane %v348, 2
        %v350 = vadd.f32 %v348, %v349
        %v351 = vrot.slane %v350, 1
        %v352 = vadd.f32 %v350, %v351
        %v353 = vmul.f32 %v352, %v343
        %v354 = vadd.f32 %v353, 1e-05
        %v355 = vrsqrt.pop %v354
        %v356 = vmul.f32 %v345, %v355
        %v357 = vpack.c.bf16 %v356, %v356
        %v358 = vld [vmem:[#allocation5] sm:$0xf]
        %v359 = vld [vmem:[#allocation5 + $0x4] sm:$0xf]
        %v360 = vld [vmem:[#allocation5 + $0x8] sm:$0xf]
        %v361 = vld [vmem:[#allocation5 + $0xc] sm:$0xf]
        %v362 = vld [vmem:[#allocation5 + $0x10] sm:$0xf]
        %v363 = vld [vmem:[#allocation5 + $0x14] sm:$0xf]
        %v364 = vld [vmem:[#allocation5 + $0x18] sm:$0xf]
        %v365 = vld [vmem:[#allocation5 + $0x1c] sm:$0xf]
        %v366 = vld [vmem:[#allocation5 + $0x20] sm:$0xf]
        %v367 = vld [vmem:[#allocation5 + $0x24] sm:$0xf]
        %v368 = vld [vmem:[#allocation5 + $0x28] sm:$0xf]
        %v369 = vld [vmem:[#allocation5 + $0x2c] sm:$0xf]
        %v370 = vld [vmem:[#allocation5 + $0x30] sm:$0xf]
        %v371 = vld [vmem:[#allocation5 + $0x34] sm:$0xf]
        %v372 = vld [vmem:[#allocation5 + $0x38] sm:$0xf]
        %v373 = vld [vmem:[#allocation5 + $0x3c] sm:$0xf]
        %v374 = vld [vmem:[%s2] sm:$0x1]
        %v376 = vlaneseq
        %v377 = vshrl.u32 %v376, 7
        %v378 = vsub.s32 0, %v377
        %v379 = vrot.slane %v374, %v378
        %v397 = vunpack.c.l.b16 %v358
        %v398 = vunpack.c.l.b16 %v359
        %v399 = vunpack.c.l.b16 %v360
        %v400 = vunpack.c.l.b16 %v361
        %v401 = vunpack.c.l.b16 %v362
        %v402 = vunpack.c.l.b16 %v363
        %v403 = vunpack.c.l.b16 %v364
        %v404 = vunpack.c.l.b16 %v365
        %v405 = vunpack.c.l.b16 %v366
        %v406 = vunpack.c.l.b16 %v367
        %v407 = vunpack.c.l.b16 %v368
        %v408 = vunpack.c.l.b16 %v369
        %v409 = vunpack.c.l.b16 %v370
        %v410 = vunpack.c.l.b16 %v371
        %v411 = vunpack.c.l.b16 %v372
        %v412 = vunpack.c.l.b16 %v373
        %v413 = vpack.c.b16 %v398, %v397
        %v414 = vpack.c.b16 %v400, %v399
        %v415 = vpack.c.b16 %v402, %v401
        %v416 = vpack.c.b16 %v404, %v403
        %v417 = vpack.c.b16 %v406, %v405
        %v418 = vpack.c.b16 %v408, %v407
        %v419 = vpack.c.b16 %v410, %v409
        %v420 = vpack.c.b16 %v412, %v411
        %429 = vmatprep.subr.bf16.mxu0 0
        %430 = vmatpush1.bf16.msra.mxu0 %v420
        %431 = vmatprep.subr.bf16.mxu0 0
        %432 = vmatpush1.bf16.msra.mxu0 %v419
        %433 = vmatprep.subr.bf16.mxu0 0
        %434 = vmatpush1.bf16.msra.mxu0 %v418
        %435 = vmatprep.subr.bf16.mxu0 0
        %436 = vmatpush1.bf16.msra.mxu0 %v417
        %437 = vmatprep.subr.bf16.mxu0 0
        %438 = vmatpush1.bf16.msra.mxu0 %v416
        %439 = vmatprep.subr.bf16.mxu0 0
        %440 = vmatpush1.bf16.msra.mxu0 %v415
        %441 = vmatprep.subr.bf16.mxu0 0
        %442 = vmatpush1.bf16.msra.mxu0 %v414
        %443 = vmatprep.subr.bf16.mxu0 0
        %444 = vmatpush1.bf16.msra.mxu0 %v413
        %445 = vmatprep.subr.bf16.mxu0 0
        %446 = vmatpush2.bf16.msra.mxu0 0
        %447 = vmatprep.subr.bf16.mxu0 0
        %448 = vmatpush2.bf16.msra.mxu0 0
        %449 = vmatprep.subr.bf16.mxu0 0
        %450 = vmatpush2.bf16.msra.mxu0 0
        %451 = vmatprep.subr.bf16.mxu0 0
        %452 = vmatpush2.bf16.msra.mxu0 0
        %453 = vmatprep.subr.bf16.mxu0 0
        %454 = vmatpush2.bf16.msra.mxu0 0
        %455 = vmatprep.subr.bf16.mxu0 0
        %456 = vmatpush2.bf16.msra.mxu0 0
        %457 = vmatprep.subr.bf16.mxu0 0
        %458 = vmatpush2.bf16.msra.mxu0 0
        %459 = vmatprep.subr.bf16.mxu0 0
        %460 = vmatpush2.bf16.msra.mxu0 0
        %461 = vmatprep.mubr.bf16.mxu0 0
        %462 = vmatmul.mubr.bf16.gmra.mxu0 %v357
        %v463 = vpop.f32.mrf.mxu0
        %v464 = vadd.f32 %v379, %v463
        %v465 = vpop.f32.mrf.mxu0
        %v466 = vpop.f32.mrf.mxu0
        %v467 = vpop.f32.mrf.mxu0
        %468 = vdwg.mxu0
        %v469 = vrot.slane %v464, 4
        %v470 = vadd.f32 %v464, %v469
        %v471 = vrot.slane %v470, 2
        %v472 = vadd.f32 %v470, %v471
        %v473 = vrot.slane %v472, 1
        %v474 = vadd.f32 %v472, %v473
        %v475 = vmul.f32 %v474, %v343
        %v476 = vsub.f32 %v464, %v475
        %v477 = vmul.f32 %v476, %v476
        %v478 = vrot.slane %v477, 4
        %v479 = vadd.f32 %v477, %v478
        %v480 = vrot.slane %v479, 2
        %v481 = vadd.f32 %v479, %v480
        %v482 = vrot.slane %v481, 1
        %v483 = vadd.f32 %v481, %v482
        %v484 = vmul.f32 %v483, %v343
        %v485 = vadd.f32 %v484, 1e-05
        %v486 = vrsqrt.pop %v485
        %v487 = vmul.f32 %v476, %v486
        %v488 = vld [vmem:[%s3] sm:$0x1]
        %v490 = vlaneseq
        %v491 = vshrl.u32 %v490, 7
        %v492 = vsub.s32 0, %v491
        %v493 = vrot.slane %v488, %v492
        %v495 = vmul.f32 %v487, %v493
        %v496 = vld [vmem:[%s4] sm:$0x1]
        %v498 = vlaneseq
        %v499 = vshrl.u32 %v498, 7
        %v500 = vsub.s32 0, %v499
        %v501 = vrot.slane %v496, %v500
        %v503 = vadd.f32 %v495, %v501
        %v504 = vmax.f32 %v503, 0.0
        %v505 = vpack.c.bf16 %v504, %v504
        %v506 = vld [vmem:[%s298] sm:$0xf]
        %v507 = vld [vmem:[%s298 + $0x4] sm:$0xf]
        %v508 = vld [vmem:[%s298 + $0x8] sm:$0xf]
        %v509 = vld [vmem:[%s298 + $0xc] sm:$0xf]
        %v510 = vld [vmem:[%s298 + $0x10] sm:$0xf]
        %v511 = vld [vmem:[%s298 + $0x14] sm:$0xf]
        %v512 = vld [vmem:[%s298 + $0x18] sm:$0xf]
        %v513 = vld [vmem:[%s298 + $0x1c] sm:$0xf]
        %v514 = vld [vmem:[%s298 + $0x20] sm:$0xf]
        %v515 = vld [vmem:[%s298 + $0x24] sm:$0xf]
        %v516 = vld [vmem:[%s298 + $0x28] sm:$0xf]
        %v517 = vld [vmem:[%s298 + $0x2c] sm:$0xf]
        %v518 = vld [vmem:[%s298 + $0x30] sm:$0xf]
        %v519 = vld [vmem:[%s298 + $0x34] sm:$0xf]
        %v520 = vld [vmem:[%s298 + $0x38] sm:$0xf]
        %v521 = vld [vmem:[%s298 + $0x3c] sm:$0xf]
        %v522 = vld [vmem:[%s334] sm:$0x1]
        %v524 = vlaneseq
        %v525 = vshrl.u32 %v524, 7
        %v526 = vsub.s32 0, %v525
        %v527 = vrot.slane %v522, %v526
        %v545 = vunpack.c.l.b16 %v506
        %v546 = vunpack.c.l.b16 %v507
        %v547 = vunpack.c.l.b16 %v508
        %v548 = vunpack.c.l.b16 %v509
        %v549 = vunpack.c.l.b16 %v510
        %v550 = vunpack.c.l.b16 %v511
        %v551 = vunpack.c.l.b16 %v512
        %v552 = vunpack.c.l.b16 %v513
        %v553 = vunpack.c.l.b16 %v514
        %v554 = vunpack.c.l.b16 %v515
        %v555 = vunpack.c.l.b16 %v516
        %v556 = vunpack.c.l.b16 %v517
        %v557 = vunpack.c.l.b16 %v518
        %v558 = vunpack.c.l.b16 %v519
        %v559 = vunpack.c.l.b16 %v520
        %v560 = vunpack.c.l.b16 %v521
        %v561 = vpack.c.b16 %v546, %v545
        %v562 = vpack.c.b16 %v548, %v547
        %v563 = vpack.c.b16 %v550, %v549
        %v564 = vpack.c.b16 %v552, %v551
        %v565 = vpack.c.b16 %v554, %v553
        %v566 = vpack.c.b16 %v556, %v555
        %v567 = vpack.c.b16 %v558, %v557
        %v568 = vpack.c.b16 %v560, %v559
        %577 = vmatprep.subr.bf16.mxu0 0
        %578 = vmatpush1.bf16.msra.mxu0 %v568
        %579 = vmatprep.subr.bf16.mxu0 0
        %580 = vmatpush1.bf16.msra.mxu0 %v567
        %581 = vmatprep.subr.bf16.mxu0 0
        %582 = vmatpush1.bf16.msra.mxu0 %v566
        %583 = vmatprep.subr.bf16.mxu0 0
        %584 = vmatpush1.bf16.msra.mxu0 %v565
        %585 = vmatprep.subr.bf16.mxu0 0
        %586 = vmatpush1.bf16.msra.mxu0 %v564
        %587 = vmatprep.subr.bf16.mxu0 0
        %588 = vmatpush1.bf16.msra.mxu0 %v563
        %589 = vmatprep.subr.bf16.mxu0 0
        %590 = vmatpush1.bf16.msra.mxu0 %v562
        %591 = vmatprep.subr.bf16.mxu0 0
        %592 = vmatpush1.bf16.msra.mxu0 %v561
        %593 = vmatprep.subr.bf16.mxu0 0
        %594 = vmatpush2.bf16.msra.mxu0 0
        %595 = vmatprep.subr.bf16.mxu0 0
        %596 = vmatpush2.bf16.msra.mxu0 0
        %597 = vmatprep.subr.bf16.mxu0 0
        %598 = vmatpush2.bf16.msra.mxu0 0
        %599 = vmatprep.subr.bf16.mxu0 0
        %600 = vmatpush2.bf16.msra.mxu0 0
        %601 = vmatprep.subr.bf16.mxu0 0
        %602 = vmatpush2.bf16.msra.mxu0 0
        %603 = vmatprep.subr.bf16.mxu0 0
        %604 = vmatpush2.bf16.msra.mxu0 0
        %605 = vmatprep.subr.bf16.mxu0 0
        %606 = vmatpush2.bf16.msra.mxu0 0
        %607 = vmatprep.subr.bf16.mxu0 0
        %608 = vmatpush2.bf16.msra.mxu0 0
        %609 = vmatprep.mubr.bf16.mxu0 0
        %610 = vmatmul.mubr.bf16.gmra.mxu0 %v505
        %v611 = vpop.f32.mrf.mxu0
        %v612 = vadd.f32 %v527, %v611
        %v613 = vpop.f32.mrf.mxu0
        %v614 = vpop.f32.mrf.mxu0
        %v615 = vpop.f32.mrf.mxu0
        %616 = vdwg.mxu0
        %617 = vst [vmem:[%s331] sm:$0xff] %v612
        %s618 = sand.u32 %s188, 1
        %s619 = scalar_lea.sflag [#allocation4], %s618
        %s620 = sand.u32 %s188, 1
        %s621 = smul.addr %s620, 8
        %s622 = scalar_lea.vmem [#allocation8], %s621
        // Predicated region
        $region61: #{tpu_custom_call.1} parent=47 // pred_check
          %p623 = pneg %p198
        $region62: #{tpu_custom_call.1} parent=47 // pred_check_branch
          %625 = sbr.rel (%p623) target = $region64
        $region63: #{tpu_custom_call.1} parent=47 // pred_region
          %s627 = ssub.s32 128, 128
          %628 = vsyncadd %s619, %s627
          %s629 = smul.addr %s23, 128
          %s630 = scalar_lea.hbm %s7, %s629
          %s632 = sshll.u32 %s622, 4
          %s633 = int_to_ptr.vmem [resolvable:$true] %s632
          %635 = dma.vmem_to_hbm [thread:$0]  %s633, 128, %s630, %s619
        $region64: #{tpu_custom_call.1} parent=47 // pred_fallthru
          _
      $region48: #{tpu_custom_call.1} parent=5 // pred_fallthru
        _
      %p636 = scmp.le.s32.totalorder 2, %s18
      // Predicated region
      $region65: #{tpu_custom_call.1} parent=5 // pred_check
        %p637 = pneg %p636
      $region66: #{tpu_custom_call.1} parent=5 // pred_check_branch
        %639 = sbr.rel (%p637) target = $region68
      $region67: #{tpu_custom_call.1} parent=5 // pred_region
        %s640 = ssub.s32 %s18, 2
        // Predicated region
        $region69: #{tpu_custom_call.1} parent=67 // pred_check
          %p641 = pneg %p204
        $region70: #{tpu_custom_call.1} parent=67 // pred_check_branch
          %643 = sbr.rel (%p641) target = $region72
        $region71: #{tpu_custom_call.1} parent=67 // pred_region
          %s644 = sand.u32 %s189, 1
          %s645 = scalar_lea.sflag [#allocation4], %s644
          %s646 = sand.u32 %s189, 1
          %s647 = smul.addr %s646, 8
          %s648 = scalar_lea.vmem [#allocation8], %s647
          %649 = dma.done %s645, 128
        $region72: #{tpu_custom_call.1} parent=67 // pred_fallthru
          _
      $region68: #{tpu_custom_call.1} parent=5 // pred_fallthru
        _
    $region6: #{tpu_custom_call.1} parent=1 // loop_footer
      %s22 = sadd.s32 1, %s18
    $region7: #{tpu_custom_call.1} parent=1 // loop_footer_branch
      %17 = sbr.rel target = $region3
    $region8: #{tpu_custom_call.1} parent=1 // loop_exit
      _
    %650 = vsyncpa [#allocation3], 1
    %s651 = scalar_lea.sflag [#allocation3], 1
    %652 = vsyncpa %s651, 1
    %653 = vsyncpa [#allocation6], 1
    %654 = vsyncpa [#allocation4], 1
    %s655 = scalar_lea.sflag [#allocation4], 1
    %656 = vsyncpa %s655, 1

</llo_original>
